<compile_context>
chip_gen: v7x
topology: tpu7x:2x2x1
jax: 0.10.0
libtpu: 0.0.40
codegen_flags: <defaults>
</compile_context>

<pallas_src>
import functools

import jax
import jax.numpy as jnp
from jax.experimental import pallas as pl
from jax.experimental.pallas import tpu as pltpu

EPS = 1e-6
_LANE = 128
_DEFAULT_TILE = 16384      # lanes per grid step (~512 KiB packed input block)
_MIN_PALLAS_N = 8192       # below this, XLA fusion of the jnp path wins


def _round_up(x, m):
    return ((x + m - 1) // m) * m


def _encode_body(p, inv_stride, eps):
    """p: (8, T) f32 packed [bx1,by1,bx2,by2,gx1,gy1,gx2,gy2].
    inv_stride: scalar or (1, T) f32. Returns (4, T) f32."""
    bx1, by1, bx2, by2 = p[0:1, :], p[1:2, :], p[2:3, :], p[3:4, :]
    gx1, gy1, gx2, gy2 = p[4:5, :], p[5:6, :], p[6:7, :], p[7:8, :]

    x_c_gt = (gx1 + gx2) * 0.5
    y_c_gt = (gy1 + gy2) * 0.5
    w_gt = gx2 - gx1
    h_gt = gy2 - gy1

    x_c = (bx1 + bx2) * 0.5
    y_c = (by1 + by2) * 0.5
    w = bx2 - bx1
    h = by2 - by1

    w_t = jnp.log(jnp.maximum(w_gt / w, eps))
    h_t = jnp.log(jnp.maximum(h_gt / h, eps))
    x_t = jnp.clip((x_c_gt - x_c) * inv_stride + 0.5, eps, 1.0 - eps)
    y_t = jnp.clip((y_c_gt - y_c) * inv_stride + 0.5, eps, 1.0 - eps)

    # One lane-dense (4, T) result -> single unmasked store.
    return jnp.concatenate([x_t, y_t, w_t, h_t], axis=0)


def _kernel_scalar_stride(inv_stride_ref, packed_ref, out_ref, *, eps):
    # inv_stride_ref: (1,) f32 in SMEM; packed_ref: (8, T); out_ref: (4, T)
    out_ref[...] = _encode_body(packed_ref[...], inv_stride_ref[0], eps)


def _kernel_perbox_stride(packed_ref, inv_stride_ref, out_ref, *, eps):
    # inv_stride_ref: (1, T) f32 in VMEM
    out_ref[...] = _encode_body(packed_ref[...], inv_stride_ref[0:1, :], eps)


def _yolo_encode_packed_pallas(packed, inv_stride, *, tile, eps):
    """packed: (8, n_pad) f32; inv_stride: (1,) f32 (scalar) or (1, n_pad) f32."""
    n_pad = packed.shape[1]
    grid = (n_pad // tile,)

    if inv_stride.ndim == 1:  # scalar stride, lives in SMEM
        kernel = functools.partial(_kernel_scalar_stride, eps=eps)
        args = (inv_stride, packed)
        in_specs = [
            pl.BlockSpec(memory_space=pltpu.MemorySpace.SMEM),
            pl.BlockSpec((8, tile), lambda i: (0, i)),
        ]
    else:  # per-box stride, streamed alongside the boxes
        kernel = functools.partial(_kernel_perbox_stride, eps=eps)
        args = (packed, inv_stride)
        in_specs = [
            pl.BlockSpec((8, tile), lambda i: (0, i)),
            pl.BlockSpec((1, tile), lambda i: (0, i)),
        ]

    return pl.pallas_call(
        kernel,
        out_shape=jax.ShapeDtypeStruct((4, n_pad), jnp.float32),
        grid=grid,
        in_specs=in_specs,
        out_specs=pl.BlockSpec((4, tile), lambda i: (0, i)),
        compiler_params=pltpu.CompilerParams(
            dimension_semantics=("parallel",)),
    )(*args)


def _yolo_encode_ref(bboxes, gt_bboxes, stride, eps=EPS):
    """Pure-jnp reference (also the small-N fast path)."""
    x_center_gt = (gt_bboxes[..., 0] + gt_bboxes[..., 2]) * 0.5
    y_center_gt = (gt_bboxes[..., 1] + gt_bboxes[..., 3]) * 0.5
    w_gt = gt_bboxes[..., 2] - gt_bboxes[..., 0]
    h_gt = gt_bboxes[..., 3] - gt_bboxes[..., 1]
    x_center = (bboxes[..., 0] + bboxes[..., 2]) * 0.5
    y_center = (bboxes[..., 1] + bboxes[..., 3]) * 0.5
    w = bboxes[..., 2] - bboxes[..., 0]
    h = bboxes[..., 3] - bboxes[..., 1]
    w_target = jnp.log(jnp.maximum(w_gt / w, eps))
    h_target = jnp.log(jnp.maximum(h_gt / h, eps))
    x_t = jnp.clip((x_center_gt - x_center) / stride + 0.5, eps, 1.0 - eps)
    y_t = jnp.clip((y_center_gt - y_center) / stride + 0.5, eps, 1.0 - eps)
    return jnp.stack([x_t, y_t, w_target, h_target], axis=-1)


def yolo_encode(bboxes, gt_bboxes, stride, eps=EPS, *,
                use_pallas=None, tile=_DEFAULT_TILE):
    """bboxes, gt_bboxes: (N, 4) float32; stride: scalar or (N,) array."""
    assert bboxes.shape[0] == gt_bboxes.shape[0]
    assert bboxes.shape[-1] == gt_bboxes.shape[-1] == 4
    n = bboxes.shape[0]

    bboxes = jnp.asarray(bboxes, jnp.float32)
    gt_bboxes = jnp.asarray(gt_bboxes, jnp.float32)
    stride_arr = jnp.asarray(stride, jnp.float32)

    if use_pallas is None:
        use_pallas = n >= _MIN_PALLAS_N
    if not use_pallas:
        # Tiny problems: kernel launch/DMA setup dominates; let XLA fuse.
        return _yolo_encode_ref(bboxes, gt_bboxes, stride_arr, eps)

    # Lane-dense packed layout: sublanes 0-3 = bboxes, 4-7 = gt_bboxes.
    # TODO(synk): carry this (8, N) layout end-to-end in the surrounding model;
    # the wrapper transposes read/write more HBM than the kernel itself.
    packed = jnp.concatenate([bboxes.T, gt_bboxes.T], axis=0)  # (8, N)

    tile_lanes = min(tile, _round_up(n, _LANE))
    n_pad = _round_up(n, tile_lanes)
    if n_pad != n:
        # Pad with benign values so padded lanes produce finite (discarded) results.
        packed = jnp.pad(packed, ((0, 0), (0, n_pad - n)), constant_values=1.0)

    if stride_arr.ndim == 0 or stride_arr.size == 1:
        inv_stride = (1.0 / stride_arr).reshape(1)            # (1,) SMEM scalar
    else:
        inv = (1.0 / stride_arr.reshape(-1)).reshape(1, n)    # (1, N)
        if n_pad != n:
            inv = jnp.pad(inv, ((0, 0), (0, n_pad - n)), constant_values=1.0)
        inv_stride = inv

    out_t = _yolo_encode_packed_pallas(packed, inv_stride,
                                       tile=tile_lanes, eps=eps)  # (4, n_pad)
    return out_t[:, :n].T  # (N, 4)


class Bbox:
    """JAX/Pallas equivalent of the PyTorch `Bbox` nn.Module (no parameters)."""

    def __call__(self, bboxes, gt_bboxes, stride, **kwargs):
        return yolo_encode(bboxes, gt_bboxes, stride, **kwargs)


if __name__ == "__main__":
    key = jax.random.PRNGKey(0)
    k1, k2, k3, k4 = jax.random.split(key, 4)
    N = 128  # number of boxes

    # Well-formed boxes: x2 > x1, y2 > y1.
    xy1 = jax.random.uniform(k1, (N, 2), jnp.float32, 0.0, 64.0)
    wh = jax.random.uniform(k2, (N, 2), jnp.float32, 1.0, 32.0)
    bboxes = jnp.concatenate([xy1, xy1 + wh], axis=-1)

    gxy1 = jax.random.uniform(k3, (N, 2), jnp.float32, 0.0, 64.0)
    gwh = jax.random.uniform(k4, (N, 2), jnp.float32, 1.0, 32.0)
    gt_bboxes = jnp.concatenate([gxy1, gxy1 + gwh], axis=-1)

    model = Bbox()

    # Scalar-stride path (force Pallas even at this small N to exercise the kernel).
    stride = jnp.float32(32.0)
    out = model(bboxes, gt_bboxes, stride, use_pallas=True)
    jax.block_until_ready(out)
    ref = _yolo_encode_ref(bboxes, gt_bboxes, stride)
    assert out.shape == (N, 4)
    assert jnp.allclose(out, ref, atol=1e-5, rtol=1e-5), float(
        jnp.max(jnp.abs(out - ref)))

    # Per-box-stride path.
    stride_vec = jnp.full((N,), 16.0, jnp.float32)
    out2 = model(bboxes, gt_bboxes, stride_vec, use_pallas=True)
    jax.block_until_ready(out2)
    ref2 = _yolo_encode_ref(bboxes, gt_bboxes, stride_vec)
    assert jnp.allclose(out2, ref2, atol=1e-5, rtol=1e-5)

    print("KERNEL_OK")
</pallas_src>

<mosaic_0001>
module attributes {stable_mosaic.version = 11 : i64} {
  func.func @_kernel_scalar_stride(%arg0: i32, %arg1: memref<1xf32, #tpu.memory_space<smem>>, %arg2: memref<8x128xf32, #tpu.memory_space<vmem>>, %arg3: memref<4x128xf32, #tpu.memory_space<vmem>>) attributes {dimension_semantics = [#tpu.dimension_semantics<parallel>], iteration_bounds = array<i64: 1>, scalar_prefetch = 0 : i64, scratch_operands = 0 : i64, tpu.core_type = #tpu.core_type<tc>, window_params = [{transform_indices = @transform_0, window_bounds = array<i64: 1>}, {transform_indices = @transform_1, window_bounds = array<i64: 8, 128>}, {transform_indices = @transform_2, window_bounds = array<i64: 4, 128>}]} {
    %c0 = arith.constant 0 : index
    %c0_0 = arith.constant 0 : index
    %0 = vector.load %arg2[%c0, %c0_0] : memref<8x128xf32, #tpu.memory_space<vmem>>, vector<8x128xf32>
    %c0_1 = arith.constant 0 : index
    %1 = memref.load %arg1[%c0_1] : memref<1xf32, #tpu.memory_space<smem>>
    %2 = vector.extract_strided_slice %0 {offsets = [0, 0], sizes = [1, 128], strides = [1, 1]} : vector<8x128xf32> to vector<1x128xf32>
    %3 = vector.extract_strided_slice %0 {offsets = [1, 0], sizes = [1, 128], strides = [1, 1]} : vector<8x128xf32> to vector<1x128xf32>
    %4 = vector.extract_strided_slice %0 {offsets = [2, 0], sizes = [1, 128], strides = [1, 1]} : vector<8x128xf32> to vector<1x128xf32>
    %5 = vector.extract_strided_slice %0 {offsets = [3, 0], sizes = [1, 128], strides = [1, 1]} : vector<8x128xf32> to vector<1x128xf32>
    %6 = vector.extract_strided_slice %0 {offsets = [4, 0], sizes = [1, 128], strides = [1, 1]} : vector<8x128xf32> to vector<1x128xf32>
    %7 = vector.extract_strided_slice %0 {offsets = [5, 0], sizes = [1, 128], strides = [1, 1]} : vector<8x128xf32> to vector<1x128xf32>
    %8 = vector.extract_strided_slice %0 {offsets = [6, 0], sizes = [1, 128], strides = [1, 1]} : vector<8x128xf32> to vector<1x128xf32>
    %9 = vector.extract_strided_slice %0 {offsets = [7, 0], sizes = [1, 128], strides = [1, 1]} : vector<8x128xf32> to vector<1x128xf32>
    %10 = arith.addf %6, %8 : vector<1x128xf32>
    %cst = arith.constant 5.000000e-01 : f32
    %11 = vector.broadcast %cst : f32 to vector<1x128xf32>
    %12 = arith.mulf %10, %11 : vector<1x128xf32>
    %13 = arith.addf %7, %9 : vector<1x128xf32>
    %cst_2 = arith.constant 5.000000e-01 : f32
    %14 = vector.broadcast %cst_2 : f32 to vector<1x128xf32>
    %15 = arith.mulf %13, %14 : vector<1x128xf32>
    %16 = arith.subf %8, %6 : vector<1x128xf32>
    %17 = arith.subf %9, %7 : vector<1x128xf32>
    %18 = arith.addf %2, %4 : vector<1x128xf32>
    %cst_3 = arith.constant 5.000000e-01 : f32
    %19 = vector.broadcast %cst_3 : f32 to vector<1x128xf32>
    %20 = arith.mulf %18, %19 : vector<1x128xf32>
    %21 = arith.addf %3, %5 : vector<1x128xf32>
    %cst_4 = arith.constant 5.000000e-01 : f32
    %22 = vector.broadcast %cst_4 : f32 to vector<1x128xf32>
    %23 = arith.mulf %21, %22 : vector<1x128xf32>
    %24 = arith.subf %4, %2 : vector<1x128xf32>
    %25 = arith.subf %5, %3 : vector<1x128xf32>
    %26 = arith.divf %16, %24 : vector<1x128xf32>
    %cst_5 = arith.constant 9.99999997E-7 : f32
    %27 = vector.broadcast %cst_5 : f32 to vector<1x128xf32>
    %28 = arith.maximumf %26, %27 : vector<1x128xf32>
    %29 = math.log %28 : vector<1x128xf32>
    %30 = arith.divf %17, %25 : vector<1x128xf32>
    %cst_6 = arith.constant 9.99999997E-7 : f32
    %31 = vector.broadcast %cst_6 : f32 to vector<1x128xf32>
    %32 = arith.maximumf %30, %31 : vector<1x128xf32>
    %33 = math.log %32 : vector<1x128xf32>
    %34 = arith.subf %12, %20 : vector<1x128xf32>
    %35 = vector.broadcast %1 : f32 to vector<1x128xf32>
    %36 = arith.mulf %34, %35 : vector<1x128xf32>
    %cst_7 = arith.constant 5.000000e-01 : f32
    %37 = vector.broadcast %cst_7 : f32 to vector<1x128xf32>
    %38 = arith.addf %36, %37 : vector<1x128xf32>
    %cst_8 = arith.constant 9.99999997E-7 : f32
    %cst_9 = arith.constant 0.999998986 : f32
    %39 = vector.broadcast %cst_8 : f32 to vector<1x128xf32>
    %40 = arith.maximumf %39, %38 : vector<1x128xf32>
    %41 = vector.broadcast %cst_9 : f32 to vector<1x128xf32>
    %42 = arith.minimumf %41, %40 : vector<1x128xf32>
    %43 = arith.subf %15, %23 : vector<1x128xf32>
    %44 = vector.broadcast %1 : f32 to vector<1x128xf32>
    %45 = arith.mulf %43, %44 : vector<1x128xf32>
    %cst_10 = arith.constant 5.000000e-01 : f32
    %46 = vector.broadcast %cst_10 : f32 to vector<1x128xf32>
    %47 = arith.addf %45, %46 : vector<1x128xf32>
    %cst_11 = arith.constant 9.99999997E-7 : f32
    %cst_12 = arith.constant 0.999998986 : f32
    %48 = vector.broadcast %cst_11 : f32 to vector<1x128xf32>
    %49 = arith.maximumf %48, %47 : vector<1x128xf32>
    %50 = vector.broadcast %cst_12 : f32 to vector<1x128xf32>
    %51 = arith.minimumf %50, %49 : vector<1x128xf32>
    %52 = tpu.concatenate %42, %51, %29, %33 in 0 : vector<1x128xf32>, vector<1x128xf32>, vector<1x128xf32>, vector<1x128xf32> -> vector<4x128xf32>
    %c0_13 = arith.constant 0 : index
    %c0_14 = arith.constant 0 : index
    %53 = vector.load %arg3[%c0_13, %c0_14] : memref<4x128xf32, #tpu.memory_space<vmem>>, vector<4x128xf32>
    tpu.vector_store %arg3[%c0_13, %c0_14], %52 {strides = array<i32>} : memref<4x128xf32, #tpu.memory_space<vmem>>, vector<4x128xf32>,
    return
  }
  func.func @transform_0(%arg0: i32) -> i32 {
    %c0_i32 = arith.constant 0 : i32
    %c0_i32_0 = arith.constant 0 : i32
    return %c0_i32 : i32
  }
  func.func @transform_1(%arg0: i32) -> (i32, i32) {
    %c0_i32 = arith.constant 0 : i32
    %c0_i32_0 = arith.constant 0 : i32
    return %c0_i32, %arg0 : i32, i32
  }
  func.func @transform_2(%arg0: i32) -> (i32, i32) {
    %c0_i32 = arith.constant 0 : i32
    %c0_i32_0 = arith.constant 0 : i32
    return %c0_i32, %arg0 : i32, i32
  }
}

</mosaic_0001>

<llo_original>
// kernel: tpu_custom_call.1
$region0: #{tpu_custom_call.1}
  #allocation0 [shape = 'u32[]', space=smem, size = 0x4, offset = 0x4, fixed_abs, tag = 'smem constant byte address 0x4 - core index']
  #allocation1 [shape = 'u32[144,128]{1,0:T(1,128)}', space=vmem, size = 0x12000, scoped, tag = 'internal scratch']
  #allocation2 [shape = 'f32[1]{0:T(128)S(6)}', space=smem, size = 0x200, scoped, tag = 'scoped memory for tpu_custom_call.1']
  %s0 = inlined_call_operand.<no memory space> [shape: f32[1], index: 0, kind: input, shape index: {}]
  %s1 = inlined_call_operand.hbm [shape: f32[8,128], index: 1, kind: input, shape index: {}]
  %s2 = inlined_call_operand.hbm [shape: f32[4,128], index: 2, kind: output, shape index: {}]
  %s3 = sld [smem:[#allocation0]]
  $region22: #{tpu_custom_call.1} parent=0
    _
  %s5 = ssub.s32 1, %s3
  %s6 = scalar_select 0, %s5, %s3
  %7 = sst [smem:[#allocation2]] %s0
  $region1: #{tpu_custom_call.1} parent=0
    #allocation3 [shape = 'u8[4096]{0}', space=vmem, size = 0x1000, scoped, tag = 'input window, operand 1, single buffered']
    #allocation4 [shape = 's32[1]{0}', space=sflag, size = 0x4, scoped, tag = 'scoped memory for tpu_custom_call.1']
    #allocation5 [shape = 's32[1]{0}', space=sflag, size = 0x4, scoped, tag = 'scoped memory for tpu_custom_call.1']
    #allocation6 [shape = 'u8[2048]{0}', space=vmem, size = 0x800, scoped, tag = 'output window, operand 0, single buffered']
    %8 = vsyncpa [#allocation4], 0
    %9 = vsyncpa [#allocation5], 0
    // Predicated region
    $region2: #{tpu_custom_call.1} parent=1 // pred_check
      _
    $region3: #{tpu_custom_call.1} parent=1 // pred_check_branch
      %11 = sbr.rel (0) target = $region5
    $region4: #{tpu_custom_call.1} parent=1 // pred_region
      _
    $region5: #{tpu_custom_call.1} parent=1 // pred_fallthru
      _
    // Predicated region
    $region6: #{tpu_custom_call.1} parent=1 // pred_check
      _
    $region7: #{tpu_custom_call.1} parent=1 // pred_check_branch
      %13 = sbr.rel (0) target = $region9
    $region8: #{tpu_custom_call.1} parent=1 // pred_region
      %s15 = ssub.s32 128, 128
      %16 = vsyncadd [#allocation4], %s15
      %s18 = sshll.u32 [#allocation3], 4
      %s19 = int_to_ptr.vmem [resolvable:$true] %s18
      %21 = dma.hbm_to_vmem [thread:$0]  %s1, 128, %s19, [#allocation4]
    $region9: #{tpu_custom_call.1} parent=1 // pred_fallthru
      _
    // Predicated region
    $region10: #{tpu_custom_call.1} parent=1 // pred_check
      _
    $region11: #{tpu_custom_call.1} parent=1 // pred_check_branch
      %23 = sbr.rel (0) target = $region13
    $region12: #{tpu_custom_call.1} parent=1 // pred_region
      %24 = dma.done [#allocation4], 128
    $region13: #{tpu_custom_call.1} parent=1 // pred_fallthru
      _
    %v25 = vld [vmem:[#allocation3] sm:$0xff]
    %s26 = sld [smem:[#allocation2]]
    %v28 = vrot.slane %v25, 2
    %v30 = vadd.f32 %v25, %v28
    %v31 = vmul.f32 %v30, 0.5
    %v32 = vrot.slane %v25, 6
    %v34 = vsub.f32 %v25, %v32
    %v36 = vrot.slane %v34, 4
    %v38 = vrcp.pop %v36
    %v39 = vmul.f32 %v34, %v38
    %v40 = vmax.f32 %v39, 1e-06
    %v41 = vlog2.pop %v40
    %v42 = vmul.f32 %v41, 0.6931472
    %v44 = vrot.slane %v31, 4
    %v46 = vsub.f32 %v31, %v44
    %v47 = vstv %s26
    %v48 = vmul.f32 %v46, %v47
    %v49 = vadd.f32 %v48, 0.5
    %v50 = vmax.f32 %v49, 1e-06
    %v51 = vmin.f32 %v50, 0.999999
    %v53 = vrot.slane %v51, 4
    %v56 = vrot.slane %v42, 4
    %vm58 = vcmask 1041408
    %v59 = vsel %vm58, %v53, %v56
    %vm60 = vcmask 1042432
    %v61 = vsel %vm60, %v59, %v56
    %62 = vst [vmem:[#allocation6] sm:$0xf] %v61
    // Predicated region
    $region14: #{tpu_custom_call.1} parent=1 // pred_check
      _
    $region15: #{tpu_custom_call.1} parent=1 // pred_check_branch
      %64 = sbr.rel (0) target = $region17
    $region16: #{tpu_custom_call.1} parent=1 // pred_region
      %s66 = ssub.s32 64, 64
      %67 = vsyncadd [#allocation5], %s66
      %s69 = sshll.u32 [#allocation6], 4
      %s70 = int_to_ptr.vmem [resolvable:$true] %s69
      %72 = dma.vmem_to_hbm [thread:$0]  %s70, 64, %s2, [#allocation5]
    $region17: #{tpu_custom_call.1} parent=1 // pred_fallthru
      _
    // Predicated region
    $region18: #{tpu_custom_call.1} parent=1 // pred_check
      _
    $region19: #{tpu_custom_call.1} parent=1 // pred_check_branch
      %74 = sbr.rel (0) target = $region21
    $region20: #{tpu_custom_call.1} parent=1 // pred_region
      %75 = dma.done [#allocation5], 64
    $region21: #{tpu_custom_call.1} parent=1 // pred_fallthru
      _
    %76 = vsyncpa [#allocation4], 1
    %77 = vsyncpa [#allocation5], 1

</llo_original>
